<compile_context>
chip_gen: v5e
topology: v5e:2x2
jax: 0.10.0
libtpu: 0.0.40
codegen_flags: <defaults>
</compile_context>

<pallas_src>
import jax
import jax.numpy as jnp
from jax.experimental import pallas as pl
from jax.experimental.pallas import tpu as pltpu

# ----------------------------- model config ---------------------------------
B = 8                          # batch (demo size)
T = 4                          # rollout length (demo size)
F = 6                          # bullet_mano_finger_num_joints
MANO_TRANS = 3
MANO_ROT = 3
OBJ_TRANS = 3
OBJ_ROT = 4                    # state stores obj rot as xyzw quaternion
OB = MANO_TRANS + MANO_ROT + F + OBJ_TRANS + OBJ_ROT          # 19 (= ob_size)
AC = MANO_TRANS + MANO_ROT + F + 3 + 3                        # 18 (= ac_size)
DELTA = MANO_TRANS + MANO_ROT + F + 3 + 3                     # 18 (= delta_size)
HID = 32                       # world_model_hidden_layer_size
IN = OB + AC                   # MLP input dim (obs || action)
LIN = OB - OBJ_ROT             # 15: columns updated purely additively
DROT = DELTA - 3               # 15: offset of delta_obj_rot


# -------------------------- shared kernel math --------------------------------
def _next_state(state, action, w1a, w1b, b1, w2, b2, w3, b3):
    """One world-model step on in-register values. delta is OB-wide (last lane 0)."""
    # MLP: 2 hidden ReLU layers + linear output.  concat(obs, action) @ w1 is
    # computed as state @ w1[:OB] + action @ w1[OB:] (no concat needed).
    h = (jnp.dot(state, w1a, preferred_element_type=jnp.float32)
         + jnp.dot(action, w1b, preferred_element_type=jnp.float32) + b1)
    h = jnp.maximum(h, 0.0)
    h = jnp.maximum(jnp.dot(h, w2, preferred_element_type=jnp.float32) + b2, 0.0)
    delta = jnp.dot(h, w3, preferred_element_type=jnp.float32) + b3   # (tb, OB)

    # obj_rot: state stores xyzw; torch permutes to wxyz, applies
    # update_quaternion_batched, normalizes, permutes back to xyzw.
    qx = state[:, LIN + 0:LIN + 1]
    qy = state[:, LIN + 1:LIN + 2]
    qz = state[:, LIN + 2:LIN + 3]
    qw = state[:, LIN + 3:LIN + 4]          # scalar part (s2)

    dx = delta[:, DROT + 0:DROT + 1] * 0.5  # v1 = delta_angle / 2
    dy = delta[:, DROT + 1:DROT + 2] * 0.5
    dz = delta[:, DROT + 2:DROT + 3] * 0.5

    # cross(v1, v2) with v2 = (qx, qy, qz)
    cx = dy * qz - dz * qy
    cy = dz * qx - dx * qz
    cz = dx * qy - dy * qx
    new_s = -(dx * qx + dy * qy + dz * qz)  # s1 = 0

    # nex (wxyz) = prev_quat + [new_s, s2 * v1 + cross]
    nw = qw + new_s
    nx = qx + qw * dx + cx
    ny = qy + qw * dy + cy
    nz = qz + qw * dz + cz

    nsq = nw * nw + nx * nx + ny * ny + nz * nz
    # exact sqrt + divide to match torch clamp(norm, 1e-5) semantics closely
    inv = 1.0 / jnp.maximum(jnp.sqrt(nsq), 1e-5)

    # Assemble the full (tb, OB) row and splice the quaternion lanes with a
    # lane-iota select -> a single full-width (lane-dense) store by the caller.
    tb, ob = state.shape
    lane = jax.lax.broadcasted_iota(jnp.int32, (tb, ob), 1)
    quat = jnp.where(lane == LIN, nx,
           jnp.where(lane == LIN + 1, ny,
           jnp.where(lane == LIN + 2, nz, nw))) * inv            # xyzw order
    return jnp.where(lane < LIN, state + delta, quat)


# ----------------------------- single-step kernel ------------------------------
def step_kernel(state_ref, action_ref, w1a_ref, w1b_ref, b1_ref,
                w2_ref, b2_ref, w3_ref, b3_ref, out_ref):
    out_ref[...] = _next_state(
        state_ref[...], action_ref[...],
        w1a_ref[...], w1b_ref[...], b1_ref[...],
        w2_ref[...], b2_ref[...], w3_ref[...], b3_ref[...])


@jax.jit
def world_model_forward(state, action, prepped):
    """One forward() step: next_state = integrate(state, MLP(obs||action))."""
    w1a, w1b, b1, w2, b2, w3, b3 = prepped
    bt = state.shape[0]
    tb = min(bt, 128)                       # batch tile (rows); 128 fills MXU height
    grid = (pl.cdiv(bt, tb),)

    const = lambda shape: pl.BlockSpec(shape, lambda i: (0, 0))   # weight: resident
    return pl.pallas_call(
        step_kernel,
        out_shape=jax.ShapeDtypeStruct((bt, OB), jnp.float32),
        grid=grid,
        in_specs=[
            pl.BlockSpec((tb, OB), lambda i: (i, 0)),   # state  (batch-tiled)
            pl.BlockSpec((tb, AC), lambda i: (i, 0)),   # action (batch-tiled)
            const((OB, HID)), const((AC, HID)), const((1, HID)),
            const((HID, HID)), const((1, HID)),
            const((HID, OB)), const((1, OB)),
        ],
        out_specs=pl.BlockSpec((tb, OB), lambda i: (i, 0)),
        input_output_aliases={0: 0},        # reuse the state buffer for the output
        compiler_params=pltpu.CompilerParams(
            dimension_semantics=("parallel",)),         # batch axis: megacore-safe
    )(state, action, w1a, w1b, b1, w2, b2, w3, b3)


# ------------------------------ fused rollout kernel ---------------------------
def rollout_kernel(state0_ref, actions_ref, w1a_ref, w1b_ref, b1_ref,
                   w2_ref, b2_ref, w3_ref, b3_ref, traj_ref, state_vmem):
    t = pl.program_id(0)

    @pl.when(t == 0)
    def _():
        state_vmem[...] = state0_ref[...]

    nxt = _next_state(
        state_vmem[...], actions_ref[0],
        w1a_ref[...], w1b_ref[...], b1_ref[...],
        w2_ref[...], b2_ref[...], w3_ref[...], b3_ref[...])
    state_vmem[...] = nxt          # carry across grid steps
    traj_ref[0] = nxt              # per-step output


@jax.jit
def world_model_rollout(state0, actions, prepped):
    """T forward() steps fused in one pallas_call (weights stay VMEM-resident)."""
    w1a, w1b, b1, w2, b2, w3, b3 = prepped
    nt, bt, _ = actions.shape

    const = lambda shape: pl.BlockSpec(shape, lambda t: (0, 0))
    return pl.pallas_call(
        rollout_kernel,
        out_shape=jax.ShapeDtypeStruct((nt, bt, OB), jnp.float32),
        grid=(nt,),
        in_specs=[
            pl.BlockSpec((bt, OB), lambda t: (0, 0)),        # initial state
            pl.BlockSpec((1, bt, AC), lambda t: (t, 0, 0)),  # per-step action
            const((OB, HID)), const((AC, HID)), const((1, HID)),
            const((HID, HID)), const((1, HID)),
            const((HID, OB)), const((1, OB)),
        ],
        out_specs=pl.BlockSpec((1, bt, OB), lambda t: (t, 0, 0)),
        scratch_shapes=[pltpu.VMEM((bt, OB), jnp.float32)],   # state carry
        compiler_params=pltpu.CompilerParams(
            dimension_semantics=("arbitrary",)),              # sequential in time
    )(state0, actions, w1a, w1b, b1, w2, b2, w3, b3)


# ------------------------------ parameter prep ---------------------------------
def prepare_params(params):
    """Split w1 for the concat-free first matmul; pad w3/b3 to OB output lanes."""
    w1, b1, w2, b2, w3, b3 = params
    w1a = w1[:OB]                                     # multiplies the observation
    w1b = w1[OB:]                                     # multiplies the action
    w3p = jnp.concatenate([w3, jnp.zeros((HID, OB - DELTA), w3.dtype)], axis=-1)
    b3p = jnp.concatenate([b3, jnp.zeros((1, OB - DELTA), b3.dtype)], axis=-1)
    return (w1a, w1b, b1, w2, b2, w3p, b3p)


# --------------------------- pure-JAX reference --------------------------------
def reference_forward(state, action, params):
    w1, b1, w2, b2, w3, b3 = params
    x = jnp.concatenate([state, action], axis=-1)
    h = jnp.maximum(x @ w1 + b1, 0.0)
    h = jnp.maximum(h @ w2 + b2, 0.0)
    delta = h @ w3 + b3

    lin_next = state[:, :LIN] + delta[:, :LIN]

    obj_rot = state[:, LIN:LIN + 4]               # xyzw
    q = obj_rot[:, [3, 0, 1, 2]]                  # wxyz
    v1 = delta[:, DROT:DROT + 3] / 2.0
    s2 = q[:, 0:1]
    v2 = q[:, 1:4]
    new_v = s2 * v1 + jnp.cross(v1, v2)
    new_s = -jnp.sum(v1 * v2, axis=-1, keepdims=True)
    nex = q + jnp.concatenate([new_s, new_v], axis=-1)
    nex = nex / jnp.maximum(jnp.linalg.norm(nex, axis=-1, keepdims=True), 1e-5)
    nex_xyzw = nex[:, [1, 2, 3, 0]]
    return jnp.concatenate([lin_next, nex_xyzw], axis=-1)


# --------------------------------- main -----------------------------------------
if __name__ == "__main__":
    key = jax.random.PRNGKey(0)
    ks = jax.random.split(key, 9)

    # deterministic synthetic parameters (ptu.build_mlp: 2 hidden ReLU layers)
    w1 = jax.random.normal(ks[0], (IN, HID), jnp.float32) * 0.1
    b1 = jax.random.normal(ks[1], (1, HID), jnp.float32) * 0.01
    w2 = jax.random.normal(ks[2], (HID, HID), jnp.float32) * 0.1
    b2 = jax.random.normal(ks[3], (1, HID), jnp.float32) * 0.01
    w3 = jax.random.normal(ks[4], (HID, DELTA), jnp.float32) * 0.1
    b3 = jax.random.normal(ks[5], (1, DELTA), jnp.float32) * 0.01
    params = (w1, b1, w2, b2, w3, b3)
    prepped = prepare_params(params)

    state = jax.random.normal(ks[6], (B, OB), jnp.float32)
    action = jax.random.normal(ks[7], (B, AC), jnp.float32)
    actions = jax.random.normal(ks[8], (T, B, AC), jnp.float32)

    # pure-JAX references (single step + unrolled rollout)
    ref_step = reference_forward(state, action, params)
    s, ref_traj = state, []
    for t in range(T):
        s = reference_forward(s, actions[t], params)
        ref_traj.append(s)
    ref_traj = jnp.stack(ref_traj, axis=0)

    # Pallas kernels
    out = jax.block_until_ready(world_model_forward(state, action, prepped))
    traj = jax.block_until_ready(world_model_rollout(state, actions, prepped))

    assert out.shape == (B, OB)
    assert traj.shape == (T, B, OB)
    assert jnp.allclose(out, ref_step, atol=1e-5, rtol=1e-5), "step mismatch vs reference"
    assert jnp.allclose(traj, ref_traj, atol=1e-4, rtol=1e-4), "rollout mismatch vs reference"

    # TODO(synk): torch.isnan debug prints and the (dead-code) obs normalization
    # statistics from the original module are intentionally not reproduced.

    print("KERNEL_OK")
</pallas_src>

<mosaic_0001>
module attributes {stable_mosaic.version = 11 : i64} {
  func.func @step_kernel(%arg0: i32, %arg1: memref<8x19xf32, #tpu.memory_space<vmem>>, %arg2: memref<8x18xf32, #tpu.memory_space<vmem>>, %arg3: memref<19x32xf32, #tpu.memory_space<vmem>>, %arg4: memref<18x32xf32, #tpu.memory_space<vmem>>, %arg5: memref<1x32xf32, #tpu.memory_space<vmem>>, %arg6: memref<32x32xf32, #tpu.memory_space<vmem>>, %arg7: memref<1x32xf32, #tpu.memory_space<vmem>>, %arg8: memref<32x19xf32, #tpu.memory_space<vmem>>, %arg9: memref<1x19xf32, #tpu.memory_space<vmem>>, %arg10: memref<8x19xf32, #tpu.memory_space<vmem>>) attributes {dimension_semantics = [#tpu.dimension_semantics<parallel>], iteration_bounds = array<i64: 1>, scalar_prefetch = 0 : i64, scratch_operands = 0 : i64, tpu.core_type = #tpu.core_type<tc>, window_params = [{transform_indices = @transform_0, window_bounds = array<i64: 8, 19>}, {transform_indices = @transform_1, window_bounds = array<i64: 8, 18>}, {pipeline_mode = #tpu.pipeline_mode<synchronous>, transform_indices = @transform_2, window_bounds = array<i64: 19, 32>}, {pipeline_mode = #tpu.pipeline_mode<synchronous>, transform_indices = @transform_3, window_bounds = array<i64: 18, 32>}, {pipeline_mode = #tpu.pipeline_mode<synchronous>, transform_indices = @transform_4, window_bounds = array<i64: 1, 32>}, {pipeline_mode = #tpu.pipeline_mode<synchronous>, transform_indices = @transform_5, window_bounds = array<i64: 32, 32>}, {pipeline_mode = #tpu.pipeline_mode<synchronous>, transform_indices = @transform_6, window_bounds = array<i64: 1, 32>}, {pipeline_mode = #tpu.pipeline_mode<synchronous>, transform_indices = @transform_7, window_bounds = array<i64: 32, 19>}, {pipeline_mode = #tpu.pipeline_mode<synchronous>, transform_indices = @transform_8, window_bounds = array<i64: 1, 19>}, {transform_indices = @transform_9, window_bounds = array<i64: 8, 19>}]} {
    %c0 = arith.constant 0 : index
    %c0_0 = arith.constant 0 : index
    %0 = vector.load %arg1[%c0, %c0_0] : memref<8x19xf32, #tpu.memory_space<vmem>>, vector<8x19xf32>
    %c0_1 = arith.constant 0 : index
    %c0_2 = arith.constant 0 : index
    %1 = vector.load %arg2[%c0_1, %c0_2] : memref<8x18xf32, #tpu.memory_space<vmem>>, vector<8x18xf32>
    %c0_3 = arith.constant 0 : index
    %c0_4 = arith.constant 0 : index
    %2 = vector.load %arg3[%c0_3, %c0_4] : memref<19x32xf32, #tpu.memory_space<vmem>>, vector<19x32xf32>
    %c0_5 = arith.constant 0 : index
    %c0_6 = arith.constant 0 : index
    %3 = vector.load %arg4[%c0_5, %c0_6] : memref<18x32xf32, #tpu.memory_space<vmem>>, vector<18x32xf32>
    %c0_7 = arith.constant 0 : index
    %c0_8 = arith.constant 0 : index
    %4 = vector.load %arg5[%c0_7, %c0_8] : memref<1x32xf32, #tpu.memory_space<vmem>>, vector<1x32xf32>
    %c0_9 = arith.constant 0 : index
    %c0_10 = arith.constant 0 : index
    %5 = vector.load %arg6[%c0_9, %c0_10] : memref<32x32xf32, #tpu.memory_space<vmem>>, vector<32x32xf32>
    %c0_11 = arith.constant 0 : index
    %c0_12 = arith.constant 0 : index
    %6 = vector.load %arg7[%c0_11, %c0_12] : memref<1x32xf32, #tpu.memory_space<vmem>>, vector<1x32xf32>
    %c0_13 = arith.constant 0 : index
    %c0_14 = arith.constant 0 : index
    %7 = vector.load %arg8[%c0_13, %c0_14] : memref<32x19xf32, #tpu.memory_space<vmem>>, vector<32x19xf32>
    %c0_15 = arith.constant 0 : index
    %c0_16 = arith.constant 0 : index
    %8 = vector.load %arg9[%c0_15, %c0_16] : memref<1x19xf32, #tpu.memory_space<vmem>>, vector<1x19xf32>
    %cst = arith.constant dense<0.000000e+00> : vector<8x32xf32>
    %9 = tpu.matmul %0, %2, %cst {dimension_numbers = #tpu.dot_dimension_numbers<[1], [0], [0], [1], [0, 0, 1, 1], [], []>} : vector<8x19xf32>, vector<19x32xf32>, vector<8x32xf32> -> vector<8x32xf32>
    %cst_17 = arith.constant dense<0.000000e+00> : vector<8x32xf32>
    %10 = tpu.matmul %1, %3, %cst_17 {dimension_numbers = #tpu.dot_dimension_numbers<[1], [0], [0], [1], [0, 0, 1, 1], [], []>} : vector<8x18xf32>, vector<18x32xf32>, vector<8x32xf32> -> vector<8x32xf32>
    %11 = arith.addf %9, %10 : vector<8x32xf32>
    %12 = vector.broadcast %4 : vector<1x32xf32> to vector<8x32xf32>
    %13 = arith.addf %11, %12 : vector<8x32xf32>
    %cst_18 = arith.constant 0.000000e+00 : f32
    %14 = vector.broadcast %cst_18 : f32 to vector<8x32xf32>
    %15 = arith.maximumf %13, %14 : vector<8x32xf32>
    %cst_19 = arith.constant dense<0.000000e+00> : vector<8x32xf32>
    %16 = tpu.matmul %15, %5, %cst_19 {dimension_numbers = #tpu.dot_dimension_numbers<[1], [0], [0], [1], [0, 0, 1, 1], [], []>} : vector<8x32xf32>, vector<32x32xf32>, vector<8x32xf32> -> vector<8x32xf32>
    %17 = vector.broadcast %6 : vector<1x32xf32> to vector<8x32xf32>
    %18 = arith.addf %16, %17 : vector<8x32xf32>
    %cst_20 = arith.constant 0.000000e+00 : f32
    %19 = vector.broadcast %cst_20 : f32 to vector<8x32xf32>
    %20 = arith.maximumf %18, %19 : vector<8x32xf32>
    %cst_21 = arith.constant dense<0.000000e+00> : vector<8x19xf32>
    %21 = tpu.matmul %20, %7, %cst_21 {dimension_numbers = #tpu.dot_dimension_numbers<[1], [0], [0], [1], [0, 0, 1, 1], [], []>} : vector<8x32xf32>, vector<32x19xf32>, vector<8x19xf32> -> vector<8x19xf32>
    %22 = vector.broadcast %8 : vector<1x19xf32> to vector<8x19xf32>
    %23 = arith.addf %21, %22 : vector<8x19xf32>
    %24 = vector.extract_strided_slice %0 {offsets = [0, 15], sizes = [8, 1], strides = [1, 1]} : vector<8x19xf32> to vector<8x1xf32>
    %25 = vector.extract_strided_slice %0 {offsets = [0, 16], sizes = [8, 1], strides = [1, 1]} : vector<8x19xf32> to vector<8x1xf32>
    %26 = vector.extract_strided_slice %0 {offsets = [0, 17], sizes = [8, 1], strides = [1, 1]} : vector<8x19xf32> to vector<8x1xf32>
    %27 = vector.extract_strided_slice %0 {offsets = [0, 18], sizes = [8, 1], strides = [1, 1]} : vector<8x19xf32> to vector<8x1xf32>
    %28 = vector.extract_strided_slice %23 {offsets = [0, 15], sizes = [8, 1], strides = [1, 1]} : vector<8x19xf32> to vector<8x1xf32>
    %cst_22 = arith.constant 5.000000e-01 : f32
    %29 = vector.broadcast %cst_22 : f32 to vector<8x1xf32>
    %30 = arith.mulf %28, %29 : vector<8x1xf32>
    %31 = vector.extract_strided_slice %23 {offsets = [0, 16], sizes = [8, 1], strides = [1, 1]} : vector<8x19xf32> to vector<8x1xf32>
    %cst_23 = arith.constant 5.000000e-01 : f32
    %32 = vector.broadcast %cst_23 : f32 to vector<8x1xf32>
    %33 = arith.mulf %31, %32 : vector<8x1xf32>
    %34 = vector.extract_strided_slice %23 {offsets = [0, 17], sizes = [8, 1], strides = [1, 1]} : vector<8x19xf32> to vector<8x1xf32>
    %cst_24 = arith.constant 5.000000e-01 : f32
    %35 = vector.broadcast %cst_24 : f32 to vector<8x1xf32>
    %36 = arith.mulf %34, %35 : vector<8x1xf32>
    %37 = arith.mulf %33, %26 : vector<8x1xf32>
    %38 = arith.mulf %36, %25 : vector<8x1xf32>
    %39 = arith.subf %37, %38 : vector<8x1xf32>
    %40 = arith.mulf %36, %24 : vector<8x1xf32>
    %41 = arith.mulf %30, %26 : vector<8x1xf32>
    %42 = arith.subf %40, %41 : vector<8x1xf32>
    %43 = arith.mulf %30, %25 : vector<8x1xf32>
    %44 = arith.mulf %33, %24 : vector<8x1xf32>
    %45 = arith.subf %43, %44 : vector<8x1xf32>
    %46 = arith.mulf %30, %24 : vector<8x1xf32>
    %47 = arith.mulf %33, %25 : vector<8x1xf32>
    %48 = arith.addf %46, %47 : vector<8x1xf32>
    %49 = arith.mulf %36, %26 : vector<8x1xf32>
    %50 = arith.addf %48, %49 : vector<8x1xf32>
    %cst_25 = arith.constant 0.000000e+00 : f32
    %51 = vector.broadcast %cst_25 : f32 to vector<8x1xf32>
    %52 = arith.subf %51, %50 : vector<8x1xf32>
    %53 = arith.addf %27, %52 : vector<8x1xf32>
    %54 = arith.mulf %27, %30 : vector<8x1xf32>
    %55 = arith.addf %24, %54 : vector<8x1xf32>
    %56 = arith.addf %55, %39 : vector<8x1xf32>
    %57 = arith.mulf %27, %33 : vector<8x1xf32>
    %58 = arith.addf %25, %57 : vector<8x1xf32>
    %59 = arith.addf %58, %42 : vector<8x1xf32>
    %60 = arith.mulf %27, %36 : vector<8x1xf32>
    %61 = arith.addf %26, %60 : vector<8x1xf32>
    %62 = arith.addf %61, %45 : vector<8x1xf32>
    %63 = arith.mulf %53, %53 : vector<8x1xf32>
    %64 = arith.mulf %56, %56 : vector<8x1xf32>
    %65 = arith.addf %63, %64 : vector<8x1xf32>
    %66 = arith.mulf %59, %59 : vector<8x1xf32>
    %67 = arith.addf %65, %66 : vector<8x1xf32>
    %68 = arith.mulf %62, %62 : vector<8x1xf32>
    %69 = arith.addf %67, %68 : vector<8x1xf32>
    %70 = math.sqrt %69 : vector<8x1xf32>
    %cst_26 = arith.constant 9.99999974E-6 : f32
    %71 = vector.broadcast %cst_26 : f32 to vector<8x1xf32>
    %72 = arith.maximumf %70, %71 : vector<8x1xf32>
    %cst_27 = arith.constant 1.000000e+00 : f32
    %73 = vector.broadcast %cst_27 : f32 to vector<8x1xf32>
    %74 = arith.divf %73, %72 : vector<8x1xf32>
    %75 = tpu.iota {dimensions = array<i32: 1>} : vector<8x19xi32>
    %c15_i32 = arith.constant 15 : i32
    %76 = vector.broadcast %c15_i32 : i32 to vector<8x19xi32>
    %77 = arith.cmpi eq, %75, %76 : vector<8x19xi32>
    %c16_i32 = arith.constant 16 : i32
    %78 = vector.broadcast %c16_i32 : i32 to vector<8x19xi32>
    %79 = arith.cmpi eq, %75, %78 : vector<8x19xi32>
    %c17_i32 = arith.constant 17 : i32
    %80 = vector.broadcast %c17_i32 : i32 to vector<8x19xi32>
    %81 = arith.cmpi eq, %75, %80 : vector<8x19xi32>
    %82 = vector.shape_cast %62 : vector<8x1xf32> to vector<8x1xf32>
    %83 = vector.broadcast %82 : vector<8x1xf32> to vector<8x19xf32>
    %84 = vector.shape_cast %53 : vector<8x1xf32> to vector<8x1xf32>
    %85 = vector.broadcast %84 : vector<8x1xf32> to vector<8x19xf32>
    %86 = arith.select %81, %83, %85 : vector<8x19xi1>, vector<8x19xf32>
    %87 = vector.shape_cast %59 : vector<8x1xf32> to vector<8x1xf32>
    %88 = vector.broadcast %87 : vector<8x1xf32> to vector<8x19xf32>
    %89 = arith.select %79, %88, %86 : vector<8x19xi1>, vector<8x19xf32>
    %90 = vector.shape_cast %56 : vector<8x1xf32> to vector<8x1xf32>
    %91 = vector.broadcast %90 : vector<8x1xf32> to vector<8x19xf32>
    %92 = arith.select %77, %91, %89 : vector<8x19xi1>, vector<8x19xf32>
    %93 = vector.broadcast %74 : vector<8x1xf32> to vector<8x19xf32>
    %94 = arith.mulf %92, %93 : vector<8x19xf32>
    %c15_i32_28 = arith.constant 15 : i32
    %95 = vector.broadcast %c15_i32_28 : i32 to vector<8x19xi32>
    %96 = arith.cmpi slt, %75, %95 : vector<8x19xi32>
    %97 = arith.addf %0, %23 : vector<8x19xf32>
    %98 = arith.select %96, %97, %94 : vector<8x19xi1>, vector<8x19xf32>
    %c0_29 = arith.constant 0 : index
    %c0_30 = arith.constant 0 : index
    %99 = vector.load %arg10[%c0_29, %c0_30] : memref<8x19xf32, #tpu.memory_space<vmem>>, vector<8x19xf32>
    tpu.vector_store %arg10[%c0_29, %c0_30], %98 {strides = array<i32>} : memref<8x19xf32, #tpu.memory_space<vmem>>, vector<8x19xf32>,
    return
  }
  func.func @transform_0(%arg0: i32) -> (i32, i32) {
    %c0_i32 = arith.constant 0 : i32
    %c0_i32_0 = arith.constant 0 : i32
    return %arg0, %c0_i32 : i32, i32
  }
  func.func @transform_1(%arg0: i32) -> (i32, i32) {
    %c0_i32 = arith.constant 0 : i32
    %c0_i32_0 = arith.constant 0 : i32
    return %arg0, %c0_i32 : i32, i32
  }
  func.func @transform_2(%arg0: i32) -> (i32, i32) {
    %c0_i32 = arith.constant 0 : i32
    %c0_i32_0 = arith.constant 0 : i32
    %c0_i32_1 = arith.constant 0 : i32
    return %c0_i32, %c0_i32_0 : i32, i32
  }
  func.func @transform_3(%arg0: i32) -> (i32, i32) {
    %c0_i32 = arith.constant 0 : i32
    %c0_i32_0 = arith.constant 0 : i32
    %c0_i32_1 = arith.constant 0 : i32
    return %c0_i32, %c0_i32_0 : i32, i32
  }
  func.func @transform_4(%arg0: i32) -> (i32, i32) {
    %c0_i32 = arith.constant 0 : i32
    %c0_i32_0 = arith.constant 0 : i32
    %c0_i32_1 = arith.constant 0 : i32
    return %c0_i32, %c0_i32_0 : i32, i32
  }
  func.func @transform_5(%arg0: i32) -> (i32, i32) {
    %c0_i32 = arith.constant 0 : i32
    %c0_i32_0 = arith.constant 0 : i32
    %c0_i32_1 = arith.constant 0 : i32
    return %c0_i32, %c0_i32_0 : i32, i32
  }
  func.func @transform_6(%arg0: i32) -> (i32, i32) {
    %c0_i32 = arith.constant 0 : i32
    %c0_i32_0 = arith.constant 0 : i32
    %c0_i32_1 = arith.constant 0 : i32
    return %c0_i32, %c0_i32_0 : i32, i32
  }
  func.func @transform_7(%arg0: i32) -> (i32, i32) {
    %c0_i32 = arith.constant 0 : i32
    %c0_i32_0 = arith.constant 0 : i32
    %c0_i32_1 = arith.constant 0 : i32
    return %c0_i32, %c0_i32_0 : i32, i32
  }
  func.func @transform_8(%arg0: i32) -> (i32, i32) {
    %c0_i32 = arith.constant 0 : i32
    %c0_i32_0 = arith.constant 0 : i32
    %c0_i32_1 = arith.constant 0 : i32
    return %c0_i32, %c0_i32_0 : i32, i32
  }
  func.func @transform_9(%arg0: i32) -> (i32, i32) {
    %c0_i32 = arith.constant 0 : i32
    %c0_i32_0 = arith.constant 0 : i32
    return %arg0, %c0_i32 : i32, i32
  }
}

</mosaic_0001>

<llo_original>
// kernel: world_model_forward.1
$region0: #{world_model_forward.1}
  #allocation0 [shape = 'u32[]', space=smem, size = 0x4, offset = 0x4, fixed_abs, tag = 'smem constant byte address 0x4 - core index']
  #allocation1 [shape = 'u32[72,128]{1,0:T(1,128)}', space=vmem, size = 0x9000, scoped, tag = 'internal scratch']
  %s0 = inlined_call_operand.hbm [shape: f32[8,19], index: 0, kind: input, shape index: {}, may-alias: {0,9}]
  %s1 = inlined_call_operand.vmem [shape: f32[8,18], index: 1, kind: input, shape index: {}]
  %s2 = inlined_call_operand.vmem [shape: f32[19,32], index: 2, kind: input, shape index: {}]
  %s3 = inlined_call_operand.hbm [shape: f32[18,32], index: 3, kind: input, shape index: {}]
  %s4 = inlined_call_operand.vmem [shape: f32[1,32], index: 4, kind: input, shape index: {}]
  %s5 = inlined_call_operand.vmem [shape: f32[32,32], index: 5, kind: input, shape index: {}]
  %s6 = inlined_call_operand.vmem [shape: f32[1,32], index: 6, kind: input, shape index: {}]
  %s7 = inlined_call_operand.vmem [shape: f32[32,19], index: 7, kind: input, shape index: {}]
  %s8 = inlined_call_operand.vmem [shape: f32[1,19], index: 8, kind: input, shape index: {}]
  %s9 = inlined_call_operand.hbm [shape: f32[8,19], index: 9, kind: output, shape index: {}, may-alias: {0,9}]
  %s10 = sld [smem:[#allocation0]]
  $region54: #{world_model_forward.1} parent=0
    _
  %s12 = ssub.s32 1, %s10
  %s13 = scalar_select 0, %s12, %s10
  $region1: #{world_model_forward.1} parent=0
    #allocation2 [shape = 'u8[4096]{0}', space=vmem, size = 0x1000, scoped, tag = 'input window, operand 0, single buffered']
    #allocation3 [shape = 's32[1]{0}', space=sflag, size = 0x4, scoped, tag = 'scoped memory for world_model_forward.1']
    #allocation4 [shape = 's32[1]{0}', space=sflag, size = 0x4, scoped, tag = 'scoped memory for world_model_forward.1']
    #allocation5 [shape = 'u8[12288]{0}', space=vmem, size = 0x3000, scoped, tag = 'input window, operand 3, single buffered']
    #allocation6 [shape = 's32[1]{0}', space=sflag, size = 0x4, scoped, tag = 'scoped memory for world_model_forward.1']
    #allocation7 [shape = 'u8[4096]{0}', space=vmem, size = 0x1000, scoped, tag = 'output window, operand 0, single buffered']
    %14 = vsyncpa [#allocation3], 0
    %15 = vsyncpa [#allocation6], 0
    %16 = vsyncpa [#allocation4], 0
    // Predicated region
    $region2: #{world_model_forward.1} parent=1 // pred_check
      _
    $region3: #{world_model_forward.1} parent=1 // pred_check_branch
      %18 = sbr.rel (0) target = $region5
    $region4: #{world_model_forward.1} parent=1 // pred_region
      %20 = vsyncadd [#allocation3], 0
      %s22 = sshll.u32 %s0, 4
      %s23 = int_to_ptr.hbm [resolvable:$true] %s22
      %s24 = sshll.u32 [#allocation2], 4
      %s25 = int_to_ptr.vmem [resolvable:$true] %s24
      %27 = dma.hbm_to_vmem [thread:$0]  %s23, 128, %s25, [#allocation3]
    $region5: #{world_model_forward.1} parent=1 // pred_fallthru
      _
    // Predicated region
    $region6: #{world_model_forward.1} parent=1 // pred_check
      _
    $region7: #{world_model_forward.1} parent=1 // pred_check_branch
      %29 = sbr.rel (0) target = $region9
    $region8: #{world_model_forward.1} parent=1 // pred_region
      _
    $region9: #{world_model_forward.1} parent=1 // pred_fallthru
      _
    // Predicated region
    $region10: #{world_model_forward.1} parent=1 // pred_check
      _
    $region11: #{world_model_forward.1} parent=1 // pred_check_branch
      %31 = sbr.rel (0) target = $region13
    $region12: #{world_model_forward.1} parent=1 // pred_region
      _
    $region13: #{world_model_forward.1} parent=1 // pred_fallthru
      _
    // Predicated region
    $region14: #{world_model_forward.1} parent=1 // pred_check
      _
    $region15: #{world_model_forward.1} parent=1 // pred_check_branch
      %33 = sbr.rel (0) target = $region17
    $region16: #{world_model_forward.1} parent=1 // pred_region
      %35 = vsyncadd [#allocation6], 0
      %s36 = sshll.u32 %s3, 4
      %s37 = int_to_ptr.hbm [resolvable:$true] %s36
      %s38 = sshll.u32 [#allocation5], 4
      %s39 = int_to_ptr.vmem [resolvable:$true] %s38
      %44 = dma.hbm_to_vmem [thread:$0]  %s37, 384, %s39, [#allocation6], 128, 128, 8
    $region17: #{world_model_forward.1} parent=1 // pred_fallthru
      _
    // Predicated region
    $region18: #{world_model_forward.1} parent=1 // pred_check
      _
    $region19: #{world_model_forward.1} parent=1 // pred_check_branch
      %46 = sbr.rel (0) target = $region21
    $region20: #{world_model_forward.1} parent=1 // pred_region
      _
    $region21: #{world_model_forward.1} parent=1 // pred_fallthru
      _
    // Predicated region
    $region22: #{world_model_forward.1} parent=1 // pred_check
      _
    $region23: #{world_model_forward.1} parent=1 // pred_check_branch
      %48 = sbr.rel (0) target = $region25
    $region24: #{world_model_forward.1} parent=1 // pred_region
      _
    $region25: #{world_model_forward.1} parent=1 // pred_fallthru
      _
    // Predicated region
    $region26: #{world_model_forward.1} parent=1 // pred_check
      _
    $region27: #{world_model_forward.1} parent=1 // pred_check_branch
      %50 = sbr.rel (0) target = $region29
    $region28: #{world_model_forward.1} parent=1 // pred_region
      _
    $region29: #{world_model_forward.1} parent=1 // pred_fallthru
      _
    // Predicated region
    $region30: #{world_model_forward.1} parent=1 // pred_check
      _
    $region31: #{world_model_forward.1} parent=1 // pred_check_branch
      %52 = sbr.rel (0) target = $region33
    $region32: #{world_model_forward.1} parent=1 // pred_region
      _
    $region33: #{world_model_forward.1} parent=1 // pred_fallthru
      _
    // Predicated region
    $region34: #{world_model_forward.1} parent=1 // pred_check
      _
    $region35: #{world_model_forward.1} parent=1 // pred_check_branch
      %54 = sbr.rel (0) target = $region37
    $region36: #{world_model_forward.1} parent=1 // pred_region
      _
    $region37: #{world_model_forward.1} parent=1 // pred_fallthru
      _
    // Predicated region
    $region38: #{world_model_forward.1} parent=1 // pred_check
      _
    $region39: #{world_model_forward.1} parent=1 // pred_check_branch
      %56 = sbr.rel (0) target = $region41
    $region40: #{world_model_forward.1} parent=1 // pred_region
      %58 = dma.done [#allocation3], 128
    $region41: #{world_model_forward.1} parent=1 // pred_fallthru
      _
    // Predicated region
    $region42: #{world_model_forward.1} parent=1 // pred_check
      _
    $region43: #{world_model_forward.1} parent=1 // pred_check_branch
      %60 = sbr.rel (0) target = $region45
    $region44: #{world_model_forward.1} parent=1 // pred_region
      %62 = dma.done [#allocation6], 384
    $region45: #{world_model_forward.1} parent=1 // pred_fallthru
      _
    %v63 = vld [vmem:[#allocation2] sm:$0xff]
    %v64 = vld [vmem:[%s1] sm:$0xff]
    %v65 = vld [vmem:[%s2] sm:$0xff]
    %v66 = vld [vmem:[%s2 + $0x8] sm:$0xff]
    %v67 = vld [vmem:[%s2 + $0x10] sm:$0x7]
    %v68 = vld [vmem:[#allocation5] sm:$0xff]
    %v69 = vld [vmem:[#allocation5 + $0x8] sm:$0xff]
    %v70 = vld [vmem:[#allocation5 + $0x10] sm:$0x3]
    %v71 = vld [vmem:[%s4] sm:$0x1]
    %v72 = vld [vmem:[%s5] sm:$0xff]
    %v73 = vld [vmem:[%s5 + $0x8] sm:$0xff]
    %v74 = vld [vmem:[%s5 + $0x10] sm:$0xff]
    %v75 = vld [vmem:[%s5 + $0x18] sm:$0xff]
    %v76 = vld [vmem:[%s6] sm:$0x1]
    %v77 = vld [vmem:[%s7] sm:$0xff]
    %v78 = vld [vmem:[%s7 + $0x8] sm:$0xff]
    %v79 = vld [vmem:[%s7 + $0x10] sm:$0xff]
    %v80 = vld [vmem:[%s7 + $0x18] sm:$0xff]
    %v81 = vld [vmem:[%s8] sm:$0x1]
    %vm82 = vcmask 146432
    %v84 = vsel %vm82, %v64, 0
    %vm86 = vcmask 1041408
    %v88 = vsel %vm86, %v70, 0
    %90 = vmatpush.msra.mxu0 0.0
    %91 = vmatpush.msra.mxu0 0.0
    %92 = vmatpush.msra.mxu0 0.0
    %93 = vmatpush.msra.mxu0 0.0
    %94 = vmatpush.msra.mxu0 0.0
    %95 = vmatpush.msra.mxu0 0.0
    %96 = vmatpush.msra.mxu0 0.0
    %97 = vmatpush.msra.mxu0 0.0
    %98 = vmatpush.msra.mxu0 0.0
    %99 = vmatpush.msra.mxu0 0.0
    %100 = vmatpush.msra.mxu0 0.0
    %101 = vmatpush.msra.mxu0 0.0
    %102 = vmatpush.msra.mxu0 0.0
    %103 = vmatpush.msra.mxu0 %v88
    %104 = vmatpush.msra.mxu0 %v69
    %105 = vmatpush.msra.mxu0 %v68
    %106 = vmatmul.f32.gmra.mxu0 %v84
    %v107 = vpop.f32.mrf.mxu0
    %v108 = vadd.f32 0.0, %v107
    %109 = vdwg.mxu0
    %vm110 = vcmask 154624
    %v112 = vsel %vm110, %v63, 0
    %vm114 = vcmask 1042432
    %v116 = vsel %vm114, %v67, 0
    %118 = vmatpush.msra.mxu0 0.0
    %119 = vmatpush.msra.mxu0 0.0
    %120 = vmatpush.msra.mxu0 0.0
    %121 = vmatpush.msra.mxu0 0.0
    %122 = vmatpush.msra.mxu0 0.0
    %123 = vmatpush.msra.mxu0 0.0
    %124 = vmatpush.msra.mxu0 0.0
    %125 = vmatpush.msra.mxu0 0.0
    %126 = vmatpush.msra.mxu0 0.0
    %127 = vmatpush.msra.mxu0 0.0
    %128 = vmatpush.msra.mxu0 0.0
    %129 = vmatpush.msra.mxu0 0.0
    %130 = vmatpush.msra.mxu0 0.0
    %131 = vmatpush.msra.mxu0 %v116
    %132 = vmatpush.msra.mxu0 %v66
    %133 = vmatpush.msra.mxu0 %v65
    %134 = vmatmul.f32.gmra.mxu0 %v112
    %v135 = vpop.f32.mrf.mxu0
    %v136 = vadd.f32 %v108, %v135
    %137 = vdwg.mxu0
    %v139 = vperm.slane %v71, 0
    %v141 = vadd.f32 %v136, %v139
    %v142 = vmax.f32 %v141, 0.0
    %v144 = vperm.slane %v76, 0
    %vm146 = vcmask 261120
    %v148 = vsel %vm146, %v142, 0
    %150 = vmatpush.msra.mxu0 0.0
    %151 = vmatpush.msra.mxu0 0.0
    %152 = vmatpush.msra.mxu0 0.0
    %153 = vmatpush.msra.mxu0 0.0
    %154 = vmatpush.msra.mxu0 0.0
    %155 = vmatpush.msra.mxu0 0.0
    %156 = vmatpush.msra.mxu0 0.0
    %157 = vmatpush.msra.mxu0 0.0
    %158 = vmatpush.msra.mxu0 0.0
    %159 = vmatpush.msra.mxu0 0.0
    %160 = vmatpush.msra.mxu0 0.0
    %161 = vmatpush.msra.mxu0 0.0
    %162 = vmatpush.msra.mxu0 %v75
    %163 = vmatpush.msra.mxu0 %v74
    %164 = vmatpush.msra.mxu0 %v73
    %165 = vmatpush.msra.mxu0 %v72
    %166 = vmatmul.f32.gmra.mxu0 %v148
    %v167 = vpop.f32.mrf.mxu0
    %v168 = vadd.f32 %v144, %v167
    %169 = vdwg.mxu0
    %v170 = vmax.f32 %v168, 0.0
    %v172 = vperm.slane %v81, 0
    %v175 = vsel %vm146, %v170, 0
    %177 = vmatpush.msra.mxu0 0.0
    %178 = vmatpush.msra.mxu0 0.0
    %179 = vmatpush.msra.mxu0 0.0
    %180 = vmatpush.msra.mxu0 0.0
    %181 = vmatpush.msra.mxu0 0.0
    %182 = vmatpush.msra.mxu0 0.0
    %183 = vmatpush.msra.mxu0 0.0
    %184 = vmatpush.msra.mxu0 0.0
    %185 = vmatpush.msra.mxu0 0.0
    %186 = vmatpush.msra.mxu0 0.0
    %187 = vmatpush.msra.mxu0 0.0
    %188 = vmatpush.msra.mxu0 0.0
    %189 = vmatpush.msra.mxu0 %v80
    %190 = vmatpush.msra.mxu0 %v79
    %191 = vmatpush.msra.mxu0 %v78
    %192 = vmatpush.msra.mxu0 %v77
    %193 = vmatmul.f32.gmra.mxu0 %v175
    %v194 = vpop.f32.mrf.mxu0
    %v195 = vadd.f32 %v172, %v194
    %196 = vdwg.mxu0
    %v197 = vmul.f32 %v195, 0.5
    %198 = vrot.lane.b32.xlu0 %v63, 127
    %v199 = vpop.permute.xlu0 %198
    %v201 = vmul.f32 %v197, %v199
    %202 = vrot.lane.b32.xlu0 %v63, 1
    %v203 = vpop.permute.xlu0 %202
    %v205 = vmul.f32 %v197, %v203
    %207 = vrot.lane.b32.xlu0 %v205, 127
    %v208 = vpop.permute.xlu0 %207
    %v210 = vsub.f32 %v201, %v208
    %211 = vrot.lane.b32.xlu0 %v63, 2
    %v212 = vpop.permute.xlu0 %211
    %v214 = vmul.f32 %v197, %v212
    %215 = vrot.lane.b32.xlu0 %v63, 126
    %v216 = vpop.permute.xlu0 %215
    %v218 = vmul.f32 %v197, %v216
    %220 = vrot.lane.b32.xlu0 %v218, 2
    %v221 = vpop.permute.xlu0 %220
    %v223 = vsub.f32 %v214, %v221
    %v224 = vmul.f32 %v197, %v63
    %226 = vrot.lane.b32.xlu0 %v224, 127
    %v227 = vpop.permute.xlu0 %226
    %v229 = vadd.f32 %v224, %v227
    %230 = vrot.lane.b32.xlu0 %v224, 126
    %v231 = vpop.permute.xlu0 %230
    %v233 = vadd.f32 %v229, %v231
    %v234 = vsub.f32 0.0, %v233
    %236 = vrot.lane.b32.xlu0 %v234, 3
    %v237 = vpop.permute.xlu0 %236
    %v239 = vadd.f32 %v63, %v237
    %241 = vrot.lane.b32.xlu0 %v197, 3
    %v242 = vpop.permute.xlu0 %241
    %v244 = vmul.f32 %v63, %v242
    %246 = vrot.lane.b32.xlu0 %v244, 125
    %v247 = vpop.permute.xlu0 %246
    %v249 = vadd.f32 %v63, %v247
    %251 = vrot.lane.b32.xlu0 %v210, 127
    %v252 = vpop.permute.xlu0 %251
    %v254 = vadd.f32 %v249, %v252
    %255 = vrot.lane.b32.xlu0 %v197, 2
    %v256 = vpop.permute.xlu0 %255
    %v258 = vmul.f32 %v63, %v256
    %260 = vrot.lane.b32.xlu0 %v258, 126
    %v261 = vpop.permute.xlu0 %260
    %v263 = vadd.f32 %v63, %v261
    %265 = vrot.lane.b32.xlu0 %v223, 127
    %v266 = vpop.permute.xlu0 %265
    %v268 = vadd.f32 %v263, %v266
    %269 = vrot.lane.b32.xlu0 %v197, 1
    %v270 = vpop.permute.xlu0 %269
    %v272 = vmul.f32 %v63, %v270
    %274 = vrot.lane.b32.xlu0 %v272, 127
    %v275 = vpop.permute.xlu0 %274
    %v277 = vadd.f32 %v63, %v275
    %278 = vrot.lane.b32.xlu0 %v210, 2
    %v279 = vpop.permute.xlu0 %278
    %v281 = vadd.f32 %v277, %v279
    %v282 = vmul.f32 %v239, %v239
    %v283 = vmul.f32 %v254, %v254
    %285 = vrot.lane.b32.xlu0 %v283, 3
    %v286 = vpop.permute.xlu0 %285
    %v288 = vadd.f32 %v282, %v286
    %v289 = vmul.f32 %v268, %v268
    %291 = vrot.lane.b32.xlu0 %v289, 2
    %v292 = vpop.permute.xlu0 %291
    %v294 = vadd.f32 %v288, %v292
    %v295 = vmul.f32 %v281, %v281
    %297 = vrot.lane.b32.xlu0 %v295, 1
    %v298 = vpop.permute.xlu0 %297
    %v300 = vadd.f32 %v294, %v298
    %v301 = vrsqrt.pop %v300
    %v302 = vmul.f32 %v301, %v300
    %v303 = vmul.f32 %v302, %v301
    %v304 = vmul.f32 0.5, %v303
    %v305 = vsub.f32 1.5, %v304
    %v306 = vmul.f32 %v301, %v305
    %v307 = vmul.f32 %v300, %v306
    %vm308 = vcmp.eq.f32.partialorder %v300, inf
    %v309 = vsel %vm308, %v300, %v307
    %vm310 = vcmp.eq.f32.partialorder %v300, 0.0
    %v311 = vand.u32 %v300, 2147483648
    %v312 = vsel %vm310, %v311, %v309
    %v313 = vmax.f32 %v312, 1e-05
    %v314 = vrcp.pop %v313
    %v315 = vmul.f32 %v313, %v314
    %v316 = vsub.f32 1.0, %v315
    %v317 = vmul.f32 %v314, %v316
    %v318 = vadd.f32 %v314, %v317
    %vm319 = vweird.f32 %v313
    %vm320 = vweird.f32 %v314
    %vm321 = vmor %vm319, %vm320
    %v322 = vsel %vm321, %v314, %v318
    %v323 = vand.u32 2147483647, %v313
    %vm324 = vcmp.eq.f32.partialorder %v323, 8.507059e+37
    %v325 = vand.u32 %v313, 2147483648
    %v326 = vor.u32 1.1754944e-38, %v325
    %v327 = vsel %vm324, %v326, %v322
    %v328 = vmul.f32 1.0, %v327
    %v329 = vlaneseq
    %v330 = vand.u32 %v329, 127
    %vm331 = vcmp.eq.s32.totalorder %v330, 15
    %vm332 = vcmp.eq.s32.totalorder %v330, 16
    %vm333 = vcmp.eq.s32.totalorder %v330, 17
    %335 = vset.pattern.permute.xlu0 17
    %336 = vperm.xlu0 %335, %v281
    %v337 = vpop.permute.xlu0 %336
    %340 = vset.pattern.permute.xlu0 18
    %341 = vperm.xlu0 %340, %v239
    %v342 = vpop.permute.xlu0 %341
    %v344 = vsel %vm333, %v337, %v342
    %346 = vset.pattern.permute.xlu0 16
    %347 = vperm.xlu0 %346, %v268
    %v348 = vpop.permute.xlu0 %347
    %v350 = vsel %vm332, %v348, %v344
    %352 = vset.pattern.permute.xlu0 15
    %353 = vperm.xlu0 %352, %v254
    %v354 = vpop.permute.xlu0 %353
    %v356 = vsel %vm331, %v354, %v350
    %358 = vset.pattern.permute.xlu0 18
    %359 = vperm.xlu0 %358, %v328
    %v360 = vpop.permute.xlu0 %359
    %v362 = vmul.f32 %v356, %v360
    %vm363 = vcmp.lt.s32.totalorder %v330, 15
    %v364 = vadd.f32 %v63, %v195
    %v365 = vsel %vm363, %v364, %v362
    %366 = vst.msk [vmem:[#allocation7] sm:$0xff] %vm110, %v365
    // Predicated region
    $region46: #{world_model_forward.1} parent=1 // pred_check
      _
    $region47: #{world_model_forward.1} parent=1 // pred_check_branch
      %368 = sbr.rel (0) target = $region49
    $region48: #{world_model_forward.1} parent=1 // pred_region
      %370 = vsyncadd [#allocation4], 0
      %s372 = sshll.u32 [#allocation7], 4
      %s373 = int_to_ptr.vmem [resolvable:$true] %s372
      %s374 = sshll.u32 %s9, 4
      %s375 = int_to_ptr.hbm [resolvable:$true] %s374
      %377 = dma.vmem_to_hbm [thread:$0]  %s373, 128, %s375, [#allocation4]
    $region49: #{world_model_forward.1} parent=1 // pred_fallthru
      _
    // Predicated region
    $region50: #{world_model_forward.1} parent=1 // pred_check
      _
    $region51: #{world_model_forward.1} parent=1 // pred_check_branch
      %379 = sbr.rel (0) target = $region53
    $region52: #{world_model_forward.1} parent=1 // pred_region
      %381 = dma.done [#allocation4], 128
    $region53: #{world_model_forward.1} parent=1 // pred_fallthru
      _
    %382 = vsyncpa [#allocation3], 1
    %383 = vsyncpa [#allocation6], 1
    %384 = vsyncpa [#allocation4], 1

</llo_original>
